<compile_context>
chip_gen: v5e
topology: v5e:2x2
jax: 0.10.0
libtpu: 0.0.40
codegen_flags: <defaults>
</compile_context>

<pallas_src>
import jax
import jax.numpy as jnp
from jax.experimental import pallas as pl
from jax.experimental.pallas import tpu as pltpu


def _round_up(x, m):
    return ((x + m - 1) // m) * m


def _fused_predictor_kernel(x_ref, w_ref, b_ref, out_ref):
    """out = x @ W_all + b_all for one (block_rows, C) tile of ROIs.

    x_ref: (tm, C) bf16, w_ref: (C, OUT_pad) bf16 (resident across grid),
    b_ref: (1, OUT_pad) f32 (resident), out_ref: (tm, OUT_pad) f32.
    """
    acc = jnp.dot(x_ref[...], w_ref[...], preferred_element_type=jnp.float32)
    out_ref[...] = (acc + b_ref[...]).astype(out_ref.dtype)


def fast_rcnn_predictor(x, w_cls, b_cls, w_bbox, b_bbox, *, block_rows=256):
    """Pallas implementation of FastRCNNPredictor.forward.

    Args:
      x:      [N, C] or [N, C, 1, 1]
      w_cls:  [C, num_classes]
      b_cls:  [num_classes] or [1, num_classes]
      w_bbox: [C, num_classes * 4]
      b_bbox: [num_classes * 4] or [1, num_classes * 4]
    Returns:
      (scores [N, num_classes], bbox_deltas [N, num_classes * 4]) in float32.
    """
    if x.ndim == 4:
        assert x.shape[2] == 1 and x.shape[3] == 1, \
            "expected [N, C, 1, 1] input when 4-D"
    x = x.reshape(x.shape[0], -1)           # x.flatten(start_dim=1)

    n, c = x.shape
    num_classes = w_cls.shape[1]
    num_bbox = w_bbox.shape[1]
    out_dim = num_classes + num_bbox

    # ---- Fuse the two heads into one weight/bias, pad lanes to 128 multiple.
    w_all = jnp.concatenate([w_cls, w_bbox], axis=1)            # [C, out_dim]
    b_all = jnp.concatenate(
        [b_cls.reshape(-1), b_bbox.reshape(-1)], axis=0)        # [out_dim]
    out_pad = _round_up(out_dim, 128)
    if out_pad != out_dim:
        w_all = jnp.pad(w_all, ((0, 0), (0, out_pad - out_dim)))
        b_all = jnp.pad(b_all, (0, out_pad - out_dim))
    b_all = b_all.reshape(1, out_pad).astype(jnp.float32)

    # ---- Row (ROI) tiling: grid over N, weights stay resident.
    tm = block_rows if n >= block_rows else _round_up(max(n, 1), 8)
    n_pad = _round_up(n, tm)
    if n_pad != n:
        x = jnp.pad(x, ((0, n_pad - n), (0, 0)))

    # ---- bf16 on the MXU, f32 accumulation.
    x_bf = x.astype(jnp.bfloat16)
    w_bf = w_all.astype(jnp.bfloat16)

    grid = (n_pad // tm,)
    fused_out = pl.pallas_call(
        _fused_predictor_kernel,
        out_shape=jax.ShapeDtypeStruct((n_pad, out_pad), jnp.float32),
        grid_spec=pltpu.PrefetchScalarGridSpec(
            num_scalar_prefetch=0,
            grid=grid,
            in_specs=[
                pl.BlockSpec((tm, c), lambda i: (i, 0)),        # x tile
                pl.BlockSpec((c, out_pad), lambda i: (0, 0)),   # fused W (resident)
                pl.BlockSpec((1, out_pad), lambda i: (0, 0)),   # fused b (resident)
            ],
            out_specs=pl.BlockSpec((tm, out_pad), lambda i: (i, 0)),
        ),
        compiler_params=pltpu.CompilerParams(
            dimension_semantics=("parallel",),       # rows independent -> both TCs on v7x
            vmem_limit_bytes=32 * 1024 * 1024,
        ),
    )(x_bf, w_bf, b_all)

    scores = fused_out[:n, :num_classes]
    bbox_deltas = fused_out[:n, num_classes:out_dim]
    return scores, bbox_deltas


def init_params(key, in_channels, num_classes, dtype=jnp.float32):
    """nn.Linear-style init; biases stored 1-D like torch.nn.Linear."""
    k1, k2, k3, k4 = jax.random.split(key, 4)
    bound = 1.0 / (in_channels ** 0.5)
    w_cls = jax.random.uniform(k1, (in_channels, num_classes), dtype,
                               minval=-bound, maxval=bound)
    b_cls = jax.random.uniform(k2, (num_classes,), dtype,
                               minval=-bound, maxval=bound)
    w_bbox = jax.random.uniform(k3, (in_channels, num_classes * 4), dtype,
                                minval=-bound, maxval=bound)
    b_bbox = jax.random.uniform(k4, (num_classes * 4,), dtype,
                                minval=-bound, maxval=bound)
    return w_cls, b_cls, w_bbox, b_bbox


if __name__ == "__main__":
    # Small shapes: N=16 ROIs, in_channels=64, num_classes=8 (incl. background).
    N, IN_CHANNELS, NUM_CLASSES = 16, 64, 8

    key = jax.random.PRNGKey(0)
    k_x, k_p = jax.random.split(key)

    # 4-D input [N, C, 1, 1] to exercise the flatten path (as after ROI pooling).
    x = jax.random.normal(k_x, (N, IN_CHANNELS, 1, 1), dtype=jnp.float32)
    w_cls, b_cls, w_bbox, b_bbox = init_params(k_p, IN_CHANNELS, NUM_CLASSES)

    scores, bbox_deltas = fast_rcnn_predictor(x, w_cls, b_cls, w_bbox, b_bbox)
    jax.block_until_ready((scores, bbox_deltas))

    assert scores.shape == (N, NUM_CLASSES)
    assert bbox_deltas.shape == (N, NUM_CLASSES * 4)

    x_flat = x.reshape(N, -1)

    # Reference 1: same bf16-input / f32-accumulate computation in plain JAX.
    xb = x_flat.astype(jnp.bfloat16)
    ref_bf_scores = jnp.dot(xb, w_cls.astype(jnp.bfloat16),
                            preferred_element_type=jnp.float32) + b_cls
    ref_bf_bbox = jnp.dot(xb, w_bbox.astype(jnp.bfloat16),
                          preferred_element_type=jnp.float32) + b_bbox
    assert jnp.allclose(scores, ref_bf_scores, atol=2e-3, rtol=2e-3)
    assert jnp.allclose(bbox_deltas, ref_bf_bbox, atol=2e-3, rtol=2e-3)

    # Reference 2: full-precision PyTorch-semantics check (loose tol for bf16 MXU).
    ref_scores = x_flat @ w_cls + b_cls
    ref_bbox = x_flat @ w_bbox + b_bbox
    assert jnp.allclose(scores, ref_scores, atol=3e-2, rtol=3e-2)
    assert jnp.allclose(bbox_deltas, ref_bbox, atol=3e-2, rtol=3e-2)

    print("KERNEL_OK")
</pallas_src>

<mosaic_0001>
module attributes {stable_mosaic.version = 11 : i64} {
  func.func @_fused_predictor_kernel(%arg0: i32, %arg1: memref<16x64xbf16, #tpu.memory_space<vmem>>, %arg2: memref<64x128xbf16, #tpu.memory_space<vmem>>, %arg3: memref<1x128xf32, #tpu.memory_space<vmem>>, %arg4: memref<16x128xf32, #tpu.memory_space<vmem>>) attributes {dimension_semantics = [#tpu.dimension_semantics<parallel>], iteration_bounds = array<i64: 1>, scalar_prefetch = 0 : i64, scratch_operands = 0 : i64, tpu.core_type = #tpu.core_type<tc>, window_params = [{transform_indices = @transform_0, window_bounds = array<i64: 16, 64>}, {pipeline_mode = #tpu.pipeline_mode<synchronous>, transform_indices = @transform_1, window_bounds = array<i64: 64, 128>}, {pipeline_mode = #tpu.pipeline_mode<synchronous>, transform_indices = @transform_2, window_bounds = array<i64: 1, 128>}, {transform_indices = @transform_3, window_bounds = array<i64: 16, 128>}]} {
    %c0 = arith.constant 0 : index
    %c0_0 = arith.constant 0 : index
    %0 = vector.load %arg1[%c0, %c0_0] : memref<16x64xbf16, #tpu.memory_space<vmem>>, vector<16x64xbf16>
    %c0_1 = arith.constant 0 : index
    %c0_2 = arith.constant 0 : index
    %1 = vector.load %arg2[%c0_1, %c0_2] : memref<64x128xbf16, #tpu.memory_space<vmem>>, vector<64x128xbf16>
    %cst = arith.constant dense<0.000000e+00> : vector<16x128xf32>
    %2 = tpu.matmul %0, %1, %cst {dimension_numbers = #tpu.dot_dimension_numbers<[1], [0], [0], [1], [0, 0, 1, 1], [], []>} : vector<16x64xbf16>, vector<64x128xbf16>, vector<16x128xf32> -> vector<16x128xf32>
    %c0_3 = arith.constant 0 : index
    %c0_4 = arith.constant 0 : index
    %3 = vector.load %arg3[%c0_3, %c0_4] : memref<1x128xf32, #tpu.memory_space<vmem>>, vector<1x128xf32>
    %4 = vector.broadcast %3 : vector<1x128xf32> to vector<16x128xf32>
    %5 = arith.addf %2, %4 : vector<16x128xf32>
    %c0_5 = arith.constant 0 : index
    %c0_6 = arith.constant 0 : index
    %6 = vector.load %arg4[%c0_5, %c0_6] : memref<16x128xf32, #tpu.memory_space<vmem>>, vector<16x128xf32>
    tpu.vector_store %arg4[%c0_5, %c0_6], %5 {strides = array<i32>} : memref<16x128xf32, #tpu.memory_space<vmem>>, vector<16x128xf32>,
    return
  }
  func.func @transform_0(%arg0: i32) -> (i32, i32) {
    %c0_i32 = arith.constant 0 : i32
    %c0_i32_0 = arith.constant 0 : i32
    return %arg0, %c0_i32 : i32, i32
  }
  func.func @transform_1(%arg0: i32) -> (i32, i32) {
    %c0_i32 = arith.constant 0 : i32
    %c0_i32_0 = arith.constant 0 : i32
    %c0_i32_1 = arith.constant 0 : i32
    return %c0_i32, %c0_i32_0 : i32, i32
  }
  func.func @transform_2(%arg0: i32) -> (i32, i32) {
    %c0_i32 = arith.constant 0 : i32
    %c0_i32_0 = arith.constant 0 : i32
    %c0_i32_1 = arith.constant 0 : i32
    return %c0_i32, %c0_i32_0 : i32, i32
  }
  func.func @transform_3(%arg0: i32) -> (i32, i32) {
    %c0_i32 = arith.constant 0 : i32
    %c0_i32_0 = arith.constant 0 : i32
    return %arg0, %c0_i32 : i32, i32
  }
}

</mosaic_0001>

<llo_original>
// kernel: tpu_custom_call.1
$region0: #{tpu_custom_call.1}
  #allocation0 [shape = 'u32[]', space=smem, size = 0x4, offset = 0x4, fixed_abs, tag = 'smem constant byte address 0x4 - core index']
  #allocation1 [shape = 'u32[72,128]{1,0:T(1,128)}', space=vmem, size = 0x9000, scoped, tag = 'internal scratch']
  %s0 = inlined_call_operand.hbm [shape: bf16[16,64], index: 0, kind: input, shape index: {}]
  %s1 = inlined_call_operand.hbm [shape: bf16[64,128], index: 1, kind: input, shape index: {}]
  %s2 = inlined_call_operand.vmem [shape: f32[1,128], index: 2, kind: input, shape index: {}]
  %s3 = inlined_call_operand.hbm [shape: f32[16,128], index: 3, kind: output, shape index: {}]
  %s4 = sld [smem:[#allocation0]]
  $region30: #{tpu_custom_call.1} parent=0
    _
  %s6 = ssub.s32 1, %s4
  %s7 = scalar_select 0, %s6, %s4
  $region1: #{tpu_custom_call.1} parent=0
    #allocation2 [shape = 'u8[4096]{0}', space=vmem, size = 0x1000, scoped, tag = 'input window, operand 0, single buffered']
    #allocation3 [shape = 's32[1]{0}', space=sflag, size = 0x4, scoped, tag = 'scoped memory for tpu_custom_call.1']
    #allocation4 [shape = 's32[1]{0}', space=sflag, size = 0x4, scoped, tag = 'scoped memory for tpu_custom_call.1']
    #allocation5 [shape = 'u8[16384]{0}', space=vmem, size = 0x4000, scoped, tag = 'input window, operand 1, single buffered']
    #allocation6 [shape = 's32[1]{0}', space=sflag, size = 0x4, scoped, tag = 'scoped memory for tpu_custom_call.1']
    #allocation7 [shape = 'u8[8192]{0}', space=vmem, size = 0x2000, scoped, tag = 'output window, operand 0, single buffered']
    %8 = vsyncpa [#allocation3], 0
    %9 = vsyncpa [#allocation6], 0
    %10 = vsyncpa [#allocation4], 0
    // Predicated region
    $region2: #{tpu_custom_call.1} parent=1 // pred_check
      _
    $region3: #{tpu_custom_call.1} parent=1 // pred_check_branch
      %12 = sbr.rel (0) target = $region5
    $region4: #{tpu_custom_call.1} parent=1 // pred_region
      %14 = vsyncadd [#allocation3], 0
      %s15 = sshll.u32 %s0, 4
      %s16 = int_to_ptr.hbm [resolvable:$true] %s15
      %s17 = sshll.u32 [#allocation2], 4
      %s18 = int_to_ptr.vmem [resolvable:$true] %s17
      %23 = dma.hbm_to_vmem [thread:$0]  %s16, 128, %s18, [#allocation3], 64, 64, 4
    $region5: #{tpu_custom_call.1} parent=1 // pred_fallthru
      _
    // Predicated region
    $region6: #{tpu_custom_call.1} parent=1 // pred_check
      _
    $region7: #{tpu_custom_call.1} parent=1 // pred_check_branch
      %25 = sbr.rel (0) target = $region9
    $region8: #{tpu_custom_call.1} parent=1 // pred_region
      %27 = vsyncadd [#allocation6], 0
      %s28 = sshll.u32 %s1, 4
      %s29 = int_to_ptr.hbm [resolvable:$true] %s28
      %s30 = sshll.u32 [#allocation5], 4
      %s31 = int_to_ptr.vmem [resolvable:$true] %s30
      %36 = dma.hbm_to_vmem [thread:$0]  %s29, 512, %s31, [#allocation6], 64, 64, 4
    $region9: #{tpu_custom_call.1} parent=1 // pred_fallthru
      _
    // Predicated region
    $region10: #{tpu_custom_call.1} parent=1 // pred_check
      _
    $region11: #{tpu_custom_call.1} parent=1 // pred_check_branch
      %38 = sbr.rel (0) target = $region13
    $region12: #{tpu_custom_call.1} parent=1 // pred_region
      _
    $region13: #{tpu_custom_call.1} parent=1 // pred_fallthru
      _
    // Predicated region
    $region14: #{tpu_custom_call.1} parent=1 // pred_check
      _
    $region15: #{tpu_custom_call.1} parent=1 // pred_check_branch
      %40 = sbr.rel (0) target = $region17
    $region16: #{tpu_custom_call.1} parent=1 // pred_region
      %42 = dma.done [#allocation3], 128
    $region17: #{tpu_custom_call.1} parent=1 // pred_fallthru
      _
    // Predicated region
    $region18: #{tpu_custom_call.1} parent=1 // pred_check
      _
    $region19: #{tpu_custom_call.1} parent=1 // pred_check_branch
      %44 = sbr.rel (0) target = $region21
    $region20: #{tpu_custom_call.1} parent=1 // pred_region
      %46 = dma.done [#allocation6], 512
    $region21: #{tpu_custom_call.1} parent=1 // pred_fallthru
      _
    %v48 = vld [vmem:[#allocation2] sm:$0xf]
    %v49 = vld [vmem:[#allocation2 + $0x4] sm:$0xf]
    %v50 = vld [vmem:[#allocation5] sm:$0xf]
    %v51 = vld [vmem:[#allocation5 + $0x4] sm:$0xf]
    %v52 = vld [vmem:[#allocation5 + $0x8] sm:$0xf]
    %v53 = vld [vmem:[#allocation5 + $0xc] sm:$0xf]
    %v54 = vld [vmem:[#allocation5 + $0x10] sm:$0xf]
    %v55 = vld [vmem:[#allocation5 + $0x14] sm:$0xf]
    %v56 = vld [vmem:[#allocation5 + $0x18] sm:$0xf]
    %v57 = vld [vmem:[#allocation5 + $0x1c] sm:$0xf]
    %v58 = vld [vmem:[%s2] sm:$0x1]
    %v60 = vperm.slane %v58, 0
    %v64 = vunpack.c.l.b16 %v48
    %v65 = vunpack.c.l.b16 %v49
    %v66 = vpack.c.b16 %v65, %v64
    %v75 = vunpack.c.l.b16 %v50
    %v76 = vunpack.c.l.b16 %v51
    %v77 = vunpack.c.l.b16 %v52
    %v78 = vunpack.c.l.b16 %v53
    %v79 = vunpack.c.l.b16 %v54
    %v80 = vunpack.c.l.b16 %v55
    %v81 = vunpack.c.l.b16 %v56
    %v82 = vunpack.c.l.b16 %v57
    %v83 = vpack.c.b16 %v76, %v75
    %v84 = vpack.c.b16 %v78, %v77
    %v85 = vpack.c.b16 %v80, %v79
    %v86 = vpack.c.b16 %v82, %v81
    %vm91 = vcmask 523264
    %v93 = vsel %vm91, %v66, 0
    %95 = vmatpush.bf16.msra.mxu0 0
    %96 = vmatpush.bf16.msra.mxu0 0
    %97 = vmatpush.bf16.msra.mxu0 0
    %98 = vmatpush.bf16.msra.mxu0 0
    %99 = vmatpush.bf16.msra.mxu0 %v86
    %100 = vmatpush.bf16.msra.mxu0 %v85
    %101 = vmatpush.bf16.msra.mxu0 %v84
    %102 = vmatpush.bf16.msra.mxu0 %v83
    %103 = vmatmul.bf16.gmra.mxu0 %v93
    %v104 = vpop.f32.mrf.mxu0
    %v105 = vadd.f32 %v60, %v104
    %v106 = vpop.f32.mrf.mxu0
    %v107 = vadd.f32 %v60, %v106
    %108 = vdwg.mxu0
    %109 = vst [vmem:[#allocation7] sm:$0xff] %v105
    %110 = vst [vmem:[#allocation7 + $0x8] sm:$0xff] %v107
    // Predicated region
    $region22: #{tpu_custom_call.1} parent=1 // pred_check
      _
    $region23: #{tpu_custom_call.1} parent=1 // pred_check_branch
      %112 = sbr.rel (0) target = $region25
    $region24: #{tpu_custom_call.1} parent=1 // pred_region
      %114 = vsyncadd [#allocation4], 0
      %s115 = sshll.u32 [#allocation7], 4
      %s116 = int_to_ptr.vmem [resolvable:$true] %s115
      %s117 = sshll.u32 %s3, 4
      %s118 = int_to_ptr.hbm [resolvable:$true] %s117
      %123 = dma.vmem_to_hbm [thread:$0]  %s116, 256, %s118, [#allocation4], 128, 128, 8
    $region25: #{tpu_custom_call.1} parent=1 // pred_fallthru
      _
    // Predicated region
    $region26: #{tpu_custom_call.1} parent=1 // pred_check
      _
    $region27: #{tpu_custom_call.1} parent=1 // pred_check_branch
      %125 = sbr.rel (0) target = $region29
    $region28: #{tpu_custom_call.1} parent=1 // pred_region
      %127 = dma.done [#allocation4], 256
    $region29: #{tpu_custom_call.1} parent=1 // pred_fallthru
      _
    %128 = vsyncpa [#allocation3], 1
    %129 = vsyncpa [#allocation6], 1
    %130 = vsyncpa [#allocation4], 1

</llo_original>
